<compile_context>
chip_gen: v6e
topology: v6e:2x2x1
jax: 0.10.0
libtpu: 0.0.40
codegen_flags: <defaults>
</compile_context>

<pallas_src>
import jax
import jax.numpy as jnp
from jax import lax
from jax.experimental import pallas as pl
from jax.experimental.pallas import tpu as pltpu

# Constants from the PyTorch module (no learnable parameters).
C1 = 0.3989422804014327       # 1/sqrt(2*pi)
C2 = 1.4142135623730951       # sqrt(2)
C3 = 4.132731354122493        # sqrt(2*pi*e)
INV_C2 = 1.0 / C2
HALF_C1 = 0.5 * C1

LANE = 128
MAX_R_TILE = 2048             # 2048 rows * 128 lanes * 4 B = 1 MiB per channel plane


def _trunc_normal_ent_kernel(x_ref, o_ref):
    # x_ref: (C, r_tile, 128)    o_ref: (r_tile, 128)
    c = x_ref.shape[0]
    x0 = x_ref[0].astype(jnp.float32)                       # shift plane

    # Single pass over channels: shifted sum / sum-of-squares accumulation.
    zeros = jnp.zeros_like(x0)
    if c <= 16:
        # Small C: fully unrolled with static plane indices.
        sum_d, sumsq_d = zeros, zeros
        for i in range(1, c):
            d = x_ref[i].astype(jnp.float32) - x0
            sum_d = sum_d + d
            sumsq_d = sumsq_d + d * d
    else:
        def body(i, carry):
            s_d, ss_d = carry
            d = x_ref[i].astype(jnp.float32) - x0
            return s_d + d, ss_d + d * d
        sum_d, sumsq_d = lax.fori_loop(1, c, body, (zeros, zeros))

    inv_c = 1.0 / c
    mean_d = sum_d * inv_c
    m = x0 + mean_d                                          # mean over C
    # unbiased variance (torch.std default ddof=1); NaN for C==1 like torch.
    ddof_scale = (1.0 / (c - 1)) if c > 1 else float("nan")
    var = (sumsq_d - sum_d * mean_d) * ddof_scale            # sum((x-m)^2)*ddof

    # rsqrt goes to the EUP slot; std and alpha via multiplies only.
    r = lax.rsqrt(var)
    s = var * r                     # sqrt(var)
    a = -m * r                      # (0 - mean) / std

    # Z = 1 - (cdf + 1e-7), written as 0.5*(1 - erf(a/sqrt(2))) - 1e-7.
    Z = 0.5 * (1.0 - lax.erf(a * INV_C2)) - 1e-07

    # EUP approximate reciprocal + one Newton-Raphson refinement (well inside
    # the 1e-4 tolerance, no VALU divide sequence).
    rinv = pl.reciprocal(Z, approx=True)
    rinv = rinv * (2.0 - Z * rinv)

    T1 = jnp.log(C3 * s * Z)
    T2 = (HALF_C1 * a) * jnp.exp(-0.5 * a * a) * rinv        # a*pdf/(2Z)
    o_ref[...] = (T1 + T2).astype(o_ref.dtype)


def _plan_tiles(B, C, R):
    """Pick r_tile / grid from C and the per-generation VMEM capacity."""
    try:
        vmem_cap = pltpu.get_tpu_info().vmem_capacity_bytes
    except Exception:
        vmem_cap = 64 * 1024 * 1024        # conservative: v7x per-TC VMEM

    # Double-buffered per-step footprint: 2 * (C inputs + 1 output) rows of
    # 128 lanes * 4 B.  Target ~45% of capacity for the pipelined blocks so
    # in-kernel f32 temporaries and compiler scratch have headroom.
    bytes_per_row = 2 * (C + 1) * LANE * 4
    rows = int(0.45 * vmem_cap) // bytes_per_row
    r_tile = max(8, min((rows // 8) * 8, MAX_R_TILE))
    if R <= r_tile:
        r_tile = R                          # full extent (legal even if not %8)
    num_r_tiles = pl.cdiv(R, r_tile)        # ragged last tile is clipped by Pallas

    # v7x has 2 TensorCores; make sure the 'parallel' grid has >= 2 steps.
    if B * num_r_tiles < 2 and R >= 16:
        r_tile = max(8, (pl.cdiv(R, 2) // 8) * 8)
        num_r_tiles = pl.cdiv(R, r_tile)

    vmem_limit = int(0.75 * vmem_cap)
    return r_tile, num_r_tiles, vmem_limit


@jax.jit
def trunc_normal_ent_map(x):
    """x: [B, C, H, W] (f32 or bf16) -> [B, H, W] f32 truncated-normal entropy."""
    B, C, H, W = x.shape
    HW = H * W

    # Only pad when H*W is not lane-aligned (at most 127 elements per row);
    # the common case (incl. the demo) streams NCHW straight from HBM.
    hw_padded = pl.cdiv(HW, LANE) * LANE
    x3 = x.reshape(B, C, HW)
    if hw_padded != HW:
        # Padded lanes compute NaN/Inf but are never reduced across lanes and
        # are sliced off below.
        x3 = jnp.pad(x3, ((0, 0), (0, 0), (0, hw_padded - HW)))
    R = hw_padded // LANE
    x4 = x3.reshape(B, C, R, LANE)

    r_tile, num_r_tiles, vmem_limit = _plan_tiles(B, C, R)

    out = pl.pallas_call(
        _trunc_normal_ent_kernel,
        out_shape=jax.ShapeDtypeStruct((B, R, LANE), jnp.float32),
        grid_spec=pltpu.PrefetchScalarGridSpec(
            num_scalar_prefetch=0,
            grid=(B, num_r_tiles),
            in_specs=[pl.BlockSpec((pl.Squeezed(), C, r_tile, LANE),
                                   lambda b, i: (b, 0, i, 0))],
            out_specs=pl.BlockSpec((pl.Squeezed(), r_tile, LANE),
                                   lambda b, i: (b, i, 0)),
        ),
        compiler_params=pltpu.CompilerParams(
            dimension_semantics=("parallel", "parallel"),
            vmem_limit_bytes=vmem_limit),
    )(x4)

    return out.reshape(B, hw_padded)[:, :HW].reshape(B, H, W)


def _reference(x):
    # Pure-JAX reference mirroring the PyTorch forward exactly.
    m = jnp.mean(x, axis=1)
    s = jnp.std(x, axis=1, ddof=1)
    a = (0.0 - m) / s
    pdf = C1 * jnp.exp(-0.5 * a * a)
    cdf = 0.5 * (1.0 + lax.erf(a / C2)) + 1e-07
    Z = 1.0 - cdf
    T1 = jnp.log(C3 * s * Z)
    T2 = a * pdf / (2.0 * Z)
    return T1 + T2


if __name__ == "__main__":
    key = jax.random.PRNGKey(0)
    B, C, H, W = 2, 4, 16, 16
    # Pre-ReLU style input with both positive and negative values.  Per-channel
    # offsets guarantee a healthy channel spread at every location, so the
    # truncated-normal entropy (which faithfully matches the PyTorch formula,
    # including its NaN regime at extreme alpha) stays finite here.
    noise = jax.random.normal(key, (B, C, H, W), dtype=jnp.float32)
    offsets = jnp.array([-1.5, -0.5, 0.5, 1.5], dtype=jnp.float32).reshape(1, C, 1, 1)
    x = offsets + 0.5 * noise

    ent = trunc_normal_ent_map(x)
    ent = jax.block_until_ready(ent)

    ref = _reference(x)
    assert ent.shape == (B, H, W), ent.shape
    assert bool(jnp.all(jnp.isfinite(ref))), "reference produced non-finite values"
    assert jnp.allclose(ent, ref, atol=1e-4, rtol=1e-4), (
        float(jnp.max(jnp.abs(ent - ref))))

    print("KERNEL_OK")
</pallas_src>

<mosaic_0001>
module attributes {stable_mosaic.version = 11 : i64} {
  func.func @_trunc_normal_ent_kernel(%arg0: i32, %arg1: i32, %arg2: memref<1x4x2x128xf32, #tpu.memory_space<vmem>>, %arg3: memref<1x2x128xf32, #tpu.memory_space<vmem>>) attributes {dimension_semantics = [#tpu.dimension_semantics<parallel>, #tpu.dimension_semantics<parallel>], iteration_bounds = array<i64: 2, 1>, scalar_prefetch = 0 : i64, scratch_operands = 0 : i64, tpu.core_type = #tpu.core_type<tc>, window_params = [{transform_indices = @transform_0, window_bounds = array<i64: 1, 4, 2, 128>}, {transform_indices = @transform_1, window_bounds = array<i64: 1, 2, 128>}]} {
    %c0 = arith.constant 0 : index
    %c0_0 = arith.constant 0 : index
    %c0_1 = arith.constant 0 : index
    %c0_2 = arith.constant 0 : index
    %0 = vector.load %arg2[%c0, %c0_0, %c0_1, %c0_2] : memref<1x4x2x128xf32, #tpu.memory_space<vmem>>, vector<1x1x2x128xf32>
    %1 = vector.shape_cast %0 : vector<1x1x2x128xf32> to vector<2x128xf32>
    %cst = arith.constant 0.000000e+00 : f32
    %2 = vector.broadcast %cst : f32 to vector<2x128xf32>
    %c0_3 = arith.constant 0 : index
    %c1 = arith.constant 1 : index
    %c0_4 = arith.constant 0 : index
    %c0_5 = arith.constant 0 : index
    %3 = vector.load %arg2[%c0_3, %c1, %c0_4, %c0_5] : memref<1x4x2x128xf32, #tpu.memory_space<vmem>>, vector<1x1x2x128xf32>
    %4 = vector.shape_cast %3 : vector<1x1x2x128xf32> to vector<2x128xf32>
    %5 = arith.subf %4, %1 : vector<2x128xf32>
    %6 = arith.addf %2, %5 : vector<2x128xf32>
    %7 = arith.mulf %5, %5 : vector<2x128xf32>
    %8 = arith.addf %2, %7 : vector<2x128xf32>
    %c0_6 = arith.constant 0 : index
    %c2 = arith.constant 2 : index
    %c0_7 = arith.constant 0 : index
    %c0_8 = arith.constant 0 : index
    %9 = vector.load %arg2[%c0_6, %c2, %c0_7, %c0_8] : memref<1x4x2x128xf32, #tpu.memory_space<vmem>>, vector<1x1x2x128xf32>
    %10 = vector.shape_cast %9 : vector<1x1x2x128xf32> to vector<2x128xf32>
    %11 = arith.subf %10, %1 : vector<2x128xf32>
    %12 = arith.addf %6, %11 : vector<2x128xf32>
    %13 = arith.mulf %11, %11 : vector<2x128xf32>
    %14 = arith.addf %8, %13 : vector<2x128xf32>
    %c0_9 = arith.constant 0 : index
    %c3 = arith.constant 3 : index
    %c0_10 = arith.constant 0 : index
    %c0_11 = arith.constant 0 : index
    %15 = vector.load %arg2[%c0_9, %c3, %c0_10, %c0_11] : memref<1x4x2x128xf32, #tpu.memory_space<vmem>>, vector<1x1x2x128xf32>
    %16 = vector.shape_cast %15 : vector<1x1x2x128xf32> to vector<2x128xf32>
    %17 = arith.subf %16, %1 : vector<2x128xf32>
    %18 = arith.addf %12, %17 : vector<2x128xf32>
    %19 = arith.mulf %17, %17 : vector<2x128xf32>
    %20 = arith.addf %14, %19 : vector<2x128xf32>
    %cst_12 = arith.constant 2.500000e-01 : f32
    %21 = vector.broadcast %cst_12 : f32 to vector<2x128xf32>
    %22 = arith.mulf %18, %21 : vector<2x128xf32>
    %23 = arith.addf %1, %22 : vector<2x128xf32>
    %24 = arith.mulf %18, %22 : vector<2x128xf32>
    %25 = arith.subf %20, %24 : vector<2x128xf32>
    %cst_13 = arith.constant 0.333333343 : f32
    %26 = vector.broadcast %cst_13 : f32 to vector<2x128xf32>
    %27 = arith.mulf %25, %26 : vector<2x128xf32>
    %28 = math.rsqrt %27 : vector<2x128xf32>
    %29 = arith.mulf %27, %28 : vector<2x128xf32>
    %cst_14 = arith.constant 0.000000e+00 : f32
    %30 = vector.broadcast %cst_14 : f32 to vector<2x128xf32>
    %31 = arith.subf %30, %23 : vector<2x128xf32>
    %32 = arith.mulf %31, %28 : vector<2x128xf32>
    %cst_15 = arith.constant 0.707106769 : f32
    %33 = vector.broadcast %cst_15 : f32 to vector<2x128xf32>
    %34 = arith.mulf %32, %33 : vector<2x128xf32>
    %35 = math.erf %34 : vector<2x128xf32>
    %cst_16 = arith.constant 1.000000e+00 : f32
    %36 = vector.broadcast %cst_16 : f32 to vector<2x128xf32>
    %37 = arith.subf %36, %35 : vector<2x128xf32>
    %cst_17 = arith.constant 5.000000e-01 : f32
    %38 = vector.broadcast %cst_17 : f32 to vector<2x128xf32>
    %39 = arith.mulf %38, %37 : vector<2x128xf32>
    %cst_18 = arith.constant 1.000000e-07 : f32
    %40 = vector.broadcast %cst_18 : f32 to vector<2x128xf32>
    %41 = arith.subf %39, %40 : vector<2x128xf32>
    %42 = tpu.reciprocal %41 {approx = true} : vector<2x128xf32> -> vector<2x128xf32>
    %43 = arith.mulf %41, %42 : vector<2x128xf32>
    %cst_19 = arith.constant 2.000000e+00 : f32
    %44 = vector.broadcast %cst_19 : f32 to vector<2x128xf32>
    %45 = arith.subf %44, %43 : vector<2x128xf32>
    %46 = arith.mulf %42, %45 : vector<2x128xf32>
    %cst_20 = arith.constant 4.13273144 : f32
    %47 = vector.broadcast %cst_20 : f32 to vector<2x128xf32>
    %48 = arith.mulf %47, %29 : vector<2x128xf32>
    %49 = arith.mulf %48, %41 : vector<2x128xf32>
    %50 = math.log %49 : vector<2x128xf32>
    %cst_21 = arith.constant 0.199471146 : f32
    %51 = vector.broadcast %cst_21 : f32 to vector<2x128xf32>
    %52 = arith.mulf %51, %32 : vector<2x128xf32>
    %cst_22 = arith.constant -5.000000e-01 : f32
    %53 = vector.broadcast %cst_22 : f32 to vector<2x128xf32>
    %54 = arith.mulf %53, %32 : vector<2x128xf32>
    %55 = arith.mulf %54, %32 : vector<2x128xf32>
    %56 = math.exp %55 : vector<2x128xf32>
    %57 = arith.mulf %52, %56 : vector<2x128xf32>
    %58 = arith.mulf %57, %46 : vector<2x128xf32>
    %59 = arith.addf %50, %58 : vector<2x128xf32>
    %c0_23 = arith.constant 0 : index
    %c0_24 = arith.constant 0 : index
    %c0_25 = arith.constant 0 : index
    %60 = vector.load %arg3[%c0_23, %c0_24, %c0_25] : memref<1x2x128xf32, #tpu.memory_space<vmem>>, vector<1x2x128xf32>
    %61 = vector.shape_cast %60 : vector<1x2x128xf32> to vector<2x128xf32>
    %62 = vector.shape_cast %59 : vector<2x128xf32> to vector<1x2x128xf32>
    tpu.vector_store %arg3[%c0_23, %c0_24, %c0_25], %62 {strides = array<i32>} : memref<1x2x128xf32, #tpu.memory_space<vmem>>, vector<1x2x128xf32>,
    return
  }
  func.func @transform_0(%arg0: i32, %arg1: i32) -> (i32, i32, i32, i32) {
    %c0_i32 = arith.constant 0 : i32
    %c0_i32_0 = arith.constant 0 : i32
    %c0_i32_1 = arith.constant 0 : i32
    return %arg0, %c0_i32, %arg1, %c0_i32_0 : i32, i32, i32, i32
  }
  func.func @transform_1(%arg0: i32, %arg1: i32) -> (i32, i32, i32) {
    %c0_i32 = arith.constant 0 : i32
    %c0_i32_0 = arith.constant 0 : i32
    return %arg0, %arg1, %c0_i32 : i32, i32, i32
  }
}

</mosaic_0001>

<llo_original>
// kernel: trunc_normal_ent_map.1
$region0: #{trunc_normal_ent_map.1}
  #allocation0 [shape = 'u32[]', space=smem, size = 0x4, offset = 0x4, fixed_abs, tag = 'smem constant byte address 0x4 - core index']
  #allocation1 [shape = 'u32[144,128]{1,0:T(1,128)}', space=vmem, size = 0x12000, scoped, tag = 'internal scratch']
  %s0 = inlined_call_operand.vmem [shape: f32[2,4,2,128], index: 0, kind: input, shape index: {}]
  %s1 = inlined_call_operand.vmem [shape: f32[2,2,128], index: 1, kind: output, shape index: {}]
  %s2 = sld [smem:[#allocation0]]
  $region37: #{trunc_normal_ent_map.1} parent=0
    _
  %s4 = ssub.s32 1, %s2
  %s5 = scalar_select 0, %s4, %s2
  loop: start=0, step=1, limit=4
  $region2: #{trunc_normal_ent_map.1} parent=0 // loop_pre_header
    _
  $region3: #{trunc_normal_ent_map.1} parent=0 // loop_header
    %s7 = sphi 0, %s11
    %p8 = scmp.ge.s32.totalorder %s7, 4
    %s14 = sphi 0, %s26
    %s15 = sphi 0, %s22
    %s16 = sphi 0, %s14
    %s17 = sphi 0, %s15
    %s18 = sphi 0, %s16
    %s19 = sphi 0, %s17
    %s31 = sphi 0, %s33
    %s34 = sphi 0, %s31
    %s35 = sphi 0, %s34
    %s51 = sphi 0, %s35
    %s59 = sphi 0, %s61
    %s62 = sphi 0, %s59
    %s63 = sphi 0, %s62
    %s79 = sphi 0, %s63
  $region4: #{trunc_normal_ent_map.1} parent=0 // loop_header_branch
    %10 = sbr.rel (%p8) target = $region8
  $region5: #{trunc_normal_ent_map.1} parent=0 // loop_body
    %s12 = ssub.s32 %s7, 1
    %s13 = ssub.s32 %s7, 2
    %s20 = sadd.s32 1, %s15
    %p21 = scmp.ge.s32.totalorder %s20, 1
    %s22 = scalar_select %p21, 0, %s20
    %s23 = sadd.s32 1, %s14
    %s24 = scalar_select %p21, %s23, %s14
    %p25 = scmp.ge.s32.totalorder %s24, 2
    %s26 = scalar_select %p25, 0, %s24
    %s27 = ssub.s32 %s14, %s26
    %s28 = ssub.s32 %s15, %s22
    %s29 = sor.u32 %s27, %s28
    %p30 = scmp.eq.s32.totalorder %s29, 0
    %s32 = sadd.s32 %s31, 1
    %s33 = scalar_select %p30, %s31, %s32
    %p36 = pneg %p30
    %p37 = scmp.eq.s32.totalorder %s7, 1
    %p38 = por %p36, %p37
    %p39 = scmp.ne.s32.totalorder %s31, %s34
    %p40 = scmp.eq.s32.totalorder %s7, 0
    %p41 = por %p39, %p40
    %p42 = scmp.ne.s32.totalorder %s31, %s34
    %p43 = scmp.eq.s32.totalorder %s12, 1
    %p44 = por %p42, %p43
    %p45 = scmp.ne.s32.totalorder %s34, %s35
    %p46 = scmp.eq.s32.totalorder %s12, 0
    %p47 = por %p45, %p46
    %p48 = scmp.ne.s32.totalorder %s34, %s35
    %p49 = scmp.eq.s32.totalorder %s13, 1
    %p50 = por %p48, %p49
    %p52 = scmp.ne.s32.totalorder %s35, %s51
    %p53 = scmp.eq.s32.totalorder %s13, 0
    %p54 = por %p52, %p53
    %s55 = ssub.s32 %s14, %s26
    %s56 = ssub.s32 %s15, %s22
    %s57 = sor.u32 %s55, %s56
    %p58 = scmp.eq.s32.totalorder %s57, 0
    %s60 = sadd.s32 %s59, 1
    %s61 = scalar_select %p58, %s59, %s60
    %p64 = pneg %p58
    %p65 = scmp.eq.s32.totalorder %s7, 1
    %p66 = por %p64, %p65
    %p67 = scmp.ne.s32.totalorder %s59, %s62
    %p68 = scmp.eq.s32.totalorder %s7, 0
    %p69 = por %p67, %p68
    %p70 = scmp.ne.s32.totalorder %s59, %s62
    %p71 = scmp.eq.s32.totalorder %s12, 1
    %p72 = por %p70, %p71
    %p73 = scmp.ne.s32.totalorder %s62, %s63
    %p74 = scmp.eq.s32.totalorder %s12, 0
    %p75 = por %p73, %p74
    %p76 = scmp.ne.s32.totalorder %s62, %s63
    %p77 = scmp.eq.s32.totalorder %s13, 1
    %p78 = por %p76, %p77
    %p80 = scmp.ne.s32.totalorder %s63, %s79
    %p81 = scmp.eq.s32.totalorder %s13, 0
    %p82 = por %p80, %p81
    %p83 = scmp.le.s32.totalorder 1, %s7
    %p84 = scmp.lt.s32.totalorder %s7, 3
    %p85 = pnand %p83, %p84
    %p86 = pneg %p85
    // Predicated region
    $region9: #{trunc_normal_ent_map.1} parent=5 // pred_check
      _
    $region10: #{trunc_normal_ent_map.1} parent=5 // pred_check_branch
      %88 = sbr.rel (%p85) target = $region12
    $region11: #{trunc_normal_ent_map.1} parent=5 // pred_region
      %s89 = ssub.s32 %s7, 1
    $region12: #{trunc_normal_ent_map.1} parent=5 // pred_fallthru
      _
    %p90 = scmp.lt.s32.totalorder %s7, 2
    // Predicated region
    $region13: #{trunc_normal_ent_map.1} parent=5 // pred_check
      %p91 = pneg %p90
    $region14: #{trunc_normal_ent_map.1} parent=5 // pred_check_branch
      %93 = sbr.rel (%p91) target = $region16
    $region15: #{trunc_normal_ent_map.1} parent=5 // pred_region
      // Predicated region
      $region17: #{trunc_normal_ent_map.1} parent=15 // pred_check
        %p94 = pneg %p41
      $region18: #{trunc_normal_ent_map.1} parent=15 // pred_check_branch
        %96 = sbr.rel (%p94) target = $region20
      $region19: #{trunc_normal_ent_map.1} parent=15 // pred_region
        %p97 = scmp.lt.s32.totalorder %s14, 1
        %s98 = scalar_select %p97, %s14, 1
        %p99 = scmp.lt.s32.totalorder %s15, 0
        %s100 = scalar_select %p99, %s15, 0
        %s101 = smul.addr %s98, 4
        %s102 = sadd.s32 %s100, %s101
        %s103 = smul.addr %s102, 2
        %s104 = scalar_lea.vmem %s0, %s103
      $region20: #{trunc_normal_ent_map.1} parent=15 // pred_fallthru
        _
    $region16: #{trunc_normal_ent_map.1} parent=5 // pred_fallthru
      _
    %p105 = scmp.le.s32.totalorder 1, %s7
    %p106 = scmp.lt.s32.totalorder %s7, 3
    %p107 = pnand %p105, %p106
    %p108 = pneg %p107
    // Predicated region
    $region21: #{trunc_normal_ent_map.1} parent=5 // pred_check
      _
    $region22: #{trunc_normal_ent_map.1} parent=5 // pred_check_branch
      %110 = sbr.rel (%p107) target = $region24
    $region23: #{trunc_normal_ent_map.1} parent=5 // pred_region
      %s111 = ssub.s32 %s7, 1
      %p112 = scmp.lt.s32.totalorder %s16, 1
      %s113 = scalar_select %p112, %s16, 1
      %p114 = scmp.lt.s32.totalorder %s17, 0
      %s115 = scalar_select %p114, %s17, 0
      %s116 = smul.addr %s113, 4
      %s117 = sadd.s32 %s115, %s116
      %s118 = smul.addr %s117, 2
      %s119 = scalar_lea.vmem %s0, %s118
      %p120 = pneg %p47
      %p121 = pneg %p44
      %p122 = pneg %p75
      %p123 = pneg %p72
      %p124 = scmp.lt.s32.totalorder %s16, 1
      %s125 = scalar_select %p124, %s16, 1
      %p126 = scmp.lt.s32.totalorder %s17, 0
      %s127 = scalar_select %p126, %s17, 0
      %s128 = sadd.s32 %s127, %s125
      %s129 = smul.addr %s128, 2
      %s130 = scalar_lea.vmem %s1, %s129
      %p131 = scmp.lt.s32.totalorder %s16, 1
      %s132 = scalar_select %p131, %s16, 1
      %p133 = scmp.lt.s32.totalorder %s17, 0
      %s134 = scalar_select %p133, %s17, 0
      %s135 = smul.addr %s132, 4
      %s136 = sadd.s32 %s134, %s135
      %s137 = smul.addr %s136, 2
      %s138 = scalar_lea.vmem %s0, %s137
      %p139 = scmp.lt.s32.totalorder %s16, 1
      %s140 = scalar_select %p139, %s16, 1
      %p141 = scmp.lt.s32.totalorder %s17, 0
      %s142 = scalar_select %p141, %s17, 0
      %s143 = sadd.s32 %s142, %s140
      %s144 = smul.addr %s143, 2
      %s145 = scalar_lea.vmem %s1, %s144
      %v146 = vld [vmem:[%s138] sm:$0x3]
      %s147 = scalar_lea.vmem %s138, 2
      %v148 = vld [vmem:[%s147] sm:$0x3]
      %v149 = vsub.f32 %v148, %v146
      %v150 = vadd.f32 %v149, 0.0
      %v151 = vmul.f32 %v149, %v149
      %v152 = vadd.f32 %v151, 0.0
      %s153 = scalar_lea.vmem %s138, 4
      %v154 = vld [vmem:[%s153] sm:$0x3]
      %v155 = vsub.f32 %v154, %v146
      %v156 = vadd.f32 %v150, %v155
      %v157 = vmul.f32 %v155, %v155
      %v158 = vadd.f32 %v152, %v157
      %s159 = scalar_lea.vmem %s138, 6
      %v160 = vld [vmem:[%s159] sm:$0x3]
      %v161 = vsub.f32 %v160, %v146
      %v162 = vadd.f32 %v156, %v161
      %v163 = vmul.f32 %v161, %v161
      %v164 = vadd.f32 %v158, %v163
      %v165 = vmul.f32 %v162, 0.25
      %v166 = vadd.f32 %v146, %v165
      %v167 = vmul.f32 %v162, %v165
      %v168 = vsub.f32 %v164, %v167
      %v169 = vmul.f32 %v168, 0.33333334
      %v170 = vrsqrt.pop %v169
      %v171 = vmul.f32 %v169, %v170
      %v172 = vsub.f32 0.0, %v166
      %v173 = vmul.f32 %v172, %v170
      %v174 = vmul.f32 %v173, 0.70710677
      %v175 = verf.f32.pop %v174
      %v176 = vsub.f32 1.0, %v175
      %v177 = vmul.f32 %v176, 0.5
      %v178 = vsub.f32 %v177, 1e-07
      %v179 = vrcp.pop %v178
      %v180 = vmul.f32 %v178, %v179
      %v181 = vsub.f32 2.0, %v180
      %v182 = vmul.f32 %v179, %v181
      %v183 = vmul.f32 %v171, 4.1327314
      %v184 = vmul.f32 %v183, %v178
      %v185 = vlog2.pop %v184
      %v186 = vmul.f32 %v185, 0.6931472
      %v187 = vmul.f32 %v173, 0.19947115
      %v188 = vmul.f32 %v173, -0.5
      %v189 = vmul.f32 %v188, %v173
      %v190 = vmul.f32 %v189, 1.442695
      %v191 = vpow.pop %v190
      %v192 = vmul.f32 %v187, %v191
      %v193 = vmul.f32 %v192, %v182
      %v194 = vadd.f32 %v186, %v193
      %195 = vst [vmem:[%s145] sm:$0x3] %v194
      %p196 = scmp.lt.s32.totalorder %s16, 1
      %s197 = scalar_select %p196, %s16, 1
      %p198 = scmp.lt.s32.totalorder %s17, 0
      %s199 = scalar_select %p198, %s17, 0
      %s200 = sadd.s32 %s199, %s197
      %s201 = smul.addr %s200, 2
      %s202 = scalar_lea.vmem %s1, %s201
      // Predicated region
      $region25: #{trunc_normal_ent_map.1} parent=23 // pred_check
        %p203 = pneg %p72
      $region26: #{trunc_normal_ent_map.1} parent=23 // pred_check_branch
        %205 = sbr.rel (%p203) target = $region28
      $region27: #{trunc_normal_ent_map.1} parent=23 // pred_region
        _
      $region28: #{trunc_normal_ent_map.1} parent=23 // pred_fallthru
        _
    $region24: #{trunc_normal_ent_map.1} parent=5 // pred_fallthru
      _
    %p206 = scmp.le.s32.totalorder 2, %s7
    // Predicated region
    $region29: #{trunc_normal_ent_map.1} parent=5 // pred_check
      %p207 = pneg %p206
    $region30: #{trunc_normal_ent_map.1} parent=5 // pred_check_branch
      %209 = sbr.rel (%p207) target = $region32
    $region31: #{trunc_normal_ent_map.1} parent=5 // pred_region
      %s210 = ssub.s32 %s7, 2
      // Predicated region
      $region33: #{trunc_normal_ent_map.1} parent=31 // pred_check
        %p211 = pneg %p78
      $region34: #{trunc_normal_ent_map.1} parent=31 // pred_check_branch
        %213 = sbr.rel (%p211) target = $region36
      $region35: #{trunc_normal_ent_map.1} parent=31 // pred_region
        %p214 = scmp.lt.s32.totalorder %s18, 1
        %s215 = scalar_select %p214, %s18, 1
        %p216 = scmp.lt.s32.totalorder %s19, 0
        %s217 = scalar_select %p216, %s19, 0
        %s218 = sadd.s32 %s217, %s215
        %s219 = smul.addr %s218, 2
        %s220 = scalar_lea.vmem %s1, %s219
      $region36: #{trunc_normal_ent_map.1} parent=31 // pred_fallthru
        _
    $region32: #{trunc_normal_ent_map.1} parent=5 // pred_fallthru
      _
  $region6: #{trunc_normal_ent_map.1} parent=0 // loop_footer
    %s11 = sadd.s32 1, %s7
  $region7: #{trunc_normal_ent_map.1} parent=0 // loop_footer_branch
    %6 = sbr.rel target = $region3
  $region8: #{trunc_normal_ent_map.1} parent=0 // loop_exit
    _

</llo_original>
